<compile_context>
chip_gen: v6e
topology: v6e:2x2x1
jax: 0.10.0
libtpu: 0.0.40
codegen_flags: <defaults>
</compile_context>

<pallas_src>
import functools

import jax
import jax.numpy as jnp
from jax import lax
from jax.experimental import pallas as pl
from jax.experimental.pallas import tpu as pltpu

VMEM = pltpu.MemorySpace.VMEM
SMEM = pltpu.MemorySpace.SMEM


def _vmem_limit_bytes():
    """Generation-aware scoped-VMEM limit: ~75% of physical, capped at 100 MiB.

    -> ~48 MiB on v7x (64 MiB physical), ~96 MiB on v5e/v6e (128 MiB physical).
    Falls back to a conservative 64 MiB if the hardware query is unavailable.
    """
    try:
        cap = int(pltpu.get_tpu_info().vmem_capacity_bytes)
        return min(cap * 3 // 4, 100 * 1024 * 1024)
    except Exception:
        return 64 * 1024 * 1024


def _const_weight_spec(shape):
    """BlockSpec for a weight with a constant block index (never revisited with
    a new block): single-buffer it to halve its VMEM footprint."""
    idx = lambda b: (0,) * len(shape)
    try:
        return pl.BlockSpec(shape, idx, pipeline_mode=pl.Buffered(1))
    except TypeError:  # older BlockSpec without pipeline_mode kwarg
        return pl.BlockSpec(shape, idx)


# ----------------------------------------------------------------------------
# Pallas kernels
# ----------------------------------------------------------------------------
def encoder_layer_kernel(x_ref, wqkv_ref, wo_ref, bias_ref, x_out_ref, *rest,
                         nheads, emit_attn):
    """One self-attention encoder layer for a single batch element (grid=(B,)).

    x_ref:    (S, H)   bf16 activations (block of one batch element)
    wqkv_ref: (H, 3H)  bf16 fused Q/K/V projection (VMEM-resident across grid)
    wo_ref:   (H, H)   bf16 output projection      (VMEM-resident across grid)
    bias_ref: (1, S)   f32 additive attention-mask bias (over the key axis)
    x_out_ref:(S, H)   bf16 residual output
    rest:     [attn_ref (NH, S, S) f32] iff emit_attn
    """
    if emit_attn:
        (attn_ref,) = rest

    S, H = x_ref.shape
    DH = H // nheads
    scale = 1.0 / float(DH) ** 0.5

    x = x_ref[...]                                          # (S, H) bf16
    bias = bias_ref[...].astype(jnp.float32)[None]          # (1, 1, S)

    # Fused QKV projection: one (S,H)@(H,3H) bf16 MXU matmul, f32 accumulation.
    qkv = jnp.dot(x, wqkv_ref[...],
                  preferred_element_type=jnp.float32).astype(jnp.bfloat16)

    # Slice Q/K/V as three lane-aligned (S, H) blocks and move heads to a
    # leading batch axis ONCE (single relayout instead of NH per-head slices).
    q = jnp.swapaxes(qkv[:, 0 * H:1 * H].reshape(S, nheads, DH), 0, 1)
    k = jnp.swapaxes(qkv[:, 1 * H:2 * H].reshape(S, nheads, DH), 0, 1)
    v = jnp.swapaxes(qkv[:, 2 * H:3 * H].reshape(S, nheads, DH), 0, 1)

    # Head-batched QK^T: one dot_general for all heads (bounds live ranges,
    # keeps the MXU fed back-to-back), mask bias added once.
    scores = jnp.einsum('nqd,nkd->nqk', q, k,
                        preferred_element_type=jnp.float32) * scale
    scores = scores + bias                                  # (NH, S, S) f32
    if emit_attn:
        # NOTE: these are post-mask pre-softmax logits (see correctness notes).
        # TODO(synk): on v7x tile this output over heads and/or emit bf16.
        attn_ref[...] = scores

    # softmax; divide moved to the EUP via approximate reciprocal.
    # TODO(synk): on v6e/v7x the exp could run in bf16 (~2x EUP throughput).
    m = jnp.max(scores, axis=-1, keepdims=True)
    e = jnp.exp(scores - m)
    inv = pl.reciprocal(jnp.sum(e, axis=-1, keepdims=True), approx=True)
    probs = (e * inv).astype(jnp.bfloat16)

    # Head-batched P@V, then ONE lane-dense relayout back to (S, H).
    ctx = jnp.einsum('nqk,nkd->nqd', probs, v,
                     preferred_element_type=jnp.float32)    # (NH, S, DH)
    ctx = jnp.swapaxes(ctx, 0, 1).reshape(S, H).astype(jnp.bfloat16)

    out = jnp.dot(ctx, wo_ref[...],
                  preferred_element_type=jnp.float32)       # (S, H) f32
    x_out_ref[...] = (x.astype(jnp.float32) + out).astype(x_out_ref.dtype)


def classifier_kernel(x_ref, w_ref, b_ref, logits_ref):
    """Linear classifier; x_ref already holds only the [CLS] token: (B, H).

    bf16 x bf16 operands with f32 accumulation (fast MXU path); bias in f32.
    """
    logits_ref[...] = (jnp.dot(x_ref[...], w_ref[...],
                               preferred_element_type=jnp.float32)
                       + b_ref[...])


def distill_loss_kernel(s_ref, t_ref, tgt_ref, loss_ref, *, alpha):
    """ClassificationDistillLoss: alpha*CE(mean) + (1-alpha)*mean_b ||s-t||_2^2."""
    s = s_ref[...].astype(jnp.float32)                      # (B, C) student
    t = t_ref[...].astype(jnp.float32)                      # (B, C) teacher
    tgt = tgt_ref[...]                                      # (B, 1) int32
    B, C = s.shape

    # cross-entropy with mean reduction
    m = jnp.max(s, axis=1, keepdims=True)
    lse = m + jnp.log(jnp.sum(jnp.exp(s - m), axis=1, keepdims=True))   # (B,1)
    classes = lax.broadcasted_iota(jnp.int32, (B, C), 1)
    onehot = (classes == tgt).astype(jnp.float32)
    correct = jnp.sum(s * onehot, axis=1, keepdims=True)                # (B,1)
    ce = jnp.sum(lse - correct) / float(B)

    # distance = mean over batch of (per-row L2 norm)^2 == sum over classes
    if alpha < 1.0:
        dist = jnp.sum((s - t) ** 2) / float(B)
    else:
        dist = 0.0
    loss_ref[0, 0] = alpha * ce + (1.0 - alpha) * dist


# ----------------------------------------------------------------------------
# pallas_call wrappers
# ----------------------------------------------------------------------------
def run_encoder_layer(x, wqkv, wo, bias, nheads, emit_attn=False):
    # TODO(synk): on v5e/v6e, batch 2-4 sequences per grid step (block (Bt,S,H))
    # to better fill the MXU; on v7x add a query-tile grid axis for the 2 TCs.
    B, S, H = x.shape
    x_out_spec = pl.BlockSpec((None, S, H), lambda b: (b, 0, 0))
    x_out_shape = jax.ShapeDtypeStruct((B, S, H), x.dtype)
    if emit_attn:
        out_shape = (x_out_shape,
                     jax.ShapeDtypeStruct((B, nheads, S, S), jnp.float32))
        out_specs = (x_out_spec,
                     pl.BlockSpec((None, nheads, S, S), lambda b: (b, 0, 0, 0)))
    else:
        out_shape = x_out_shape
        out_specs = x_out_spec

    result = pl.pallas_call(
        functools.partial(encoder_layer_kernel, nheads=nheads,
                          emit_attn=emit_attn),
        out_shape=out_shape,
        grid_spec=pltpu.PrefetchScalarGridSpec(
            num_scalar_prefetch=0,
            grid=(B,),
            in_specs=[
                # activations: one batch element per grid step (auto-pipelined)
                pl.BlockSpec((None, S, H), lambda b: (b, 0, 0)),
                # fused QKV + output-proj weights: constant block index,
                # single-buffered -> fetched once, one VMEM copy
                _const_weight_spec((H, 3 * H)),
                _const_weight_spec((H, H)),
                # per-batch attention-mask bias
                pl.BlockSpec((None, 1, S), lambda b: (b, 0, 0)),
            ],
            out_specs=out_specs,
        ),
        compiler_params=pltpu.CompilerParams(
            dimension_semantics=("parallel",),        # megacore-shard the batch
            vmem_limit_bytes=_vmem_limit_bytes(),     # generation-dependent
        ),
    )(x, wqkv, wo, bias)
    if emit_attn:
        return result[0], result[1]
    return result


def run_classifier(x_cls, w, b):
    """x_cls: (B, H) -- only the [CLS] token, sliced in glue (S x less DMA)."""
    B = x_cls.shape[0]
    C = w.shape[1]
    return pl.pallas_call(
        classifier_kernel,
        out_shape=jax.ShapeDtypeStruct((B, C), jnp.float32),
        in_specs=[pl.BlockSpec(memory_space=VMEM)] * 3,
        out_specs=pl.BlockSpec(memory_space=VMEM),
    )(x_cls, w, b)


def run_distill_loss(logits, targets, target_logits, alpha):
    B, C = logits.shape
    tgt2d = targets.reshape(B, 1).astype(jnp.int32)
    loss = pl.pallas_call(
        functools.partial(distill_loss_kernel, alpha=float(alpha)),
        out_shape=jax.ShapeDtypeStruct((1, 1), jnp.float32),
        in_specs=[pl.BlockSpec(memory_space=VMEM)] * 3,
        out_specs=pl.BlockSpec(memory_space=SMEM),
    )(logits, target_logits, tgt2d)
    return loss[0, 0]


# ----------------------------------------------------------------------------
# synthetic BERT-with-classifier (teacher / student) in JAX glue + kernels
# ----------------------------------------------------------------------------
def init_bert_params(key, *, num_layers, vocab, max_seq, hidden, nheads, nclasses):
    keys = list(jax.random.split(key, 5 + 2 * num_layers))
    nrm = lambda k, shape, dt=jnp.float32: (
        0.02 * jax.random.normal(k, shape)).astype(dt)
    params = {
        "nheads": nheads,
        "word_emb": nrm(keys[0], (vocab, hidden)),
        "pos_emb": nrm(keys[1], (max_seq, hidden)),
        "type_emb": nrm(keys[2], (2, hidden)),
        # classifier weight kept in bf16 for the fast MXU path, bias in f32
        "wc": nrm(keys[3], (hidden, nclasses), jnp.bfloat16),
        "bc": (0.01 * jax.random.normal(keys[4], (1, nclasses))).astype(jnp.float32),
        "layers": [],
    }
    for l in range(num_layers):
        kq, ko = keys[5 + 2 * l], keys[6 + 2 * l]
        params["layers"].append({
            # fused [wq | wk | wv] along the output axis, stored in bf16
            "wqkv": nrm(kq, (hidden, 3 * hidden), jnp.bfloat16),
            "wo": nrm(ko, (hidden, hidden), jnp.bfloat16),
        })
    return params


def bert_forward(params, input_ids, token_type_ids=None, attention_mask=None,
                 position_ids=None, return_attention=False):
    """Returns (classification_logits, stacked_attention_logits_or_None)."""
    B, S = input_ids.shape
    if token_type_ids is None:
        token_type_ids = jnp.zeros((B, S), jnp.int32)
    if position_ids is None:
        position_ids = jnp.broadcast_to(
            jnp.arange(S, dtype=jnp.int32)[None, :], (B, S))
    if attention_mask is None:
        attention_mask = jnp.ones((B, S), jnp.float32)

    # embedding lookup (glue); activations kept in bf16 (halves HBM traffic)
    x = (jnp.take(params["word_emb"], input_ids, axis=0)
         + jnp.take(params["pos_emb"], position_ids, axis=0)
         + jnp.take(params["type_emb"], token_type_ids, axis=0)
         ).astype(jnp.bfloat16)
    bias = ((1.0 - attention_mask.astype(jnp.float32)) * -1e9).reshape(B, 1, S)

    attn_all = []
    for layer in params["layers"]:
        if return_attention:
            x, attn = run_encoder_layer(x, layer["wqkv"], layer["wo"], bias,
                                        params["nheads"], emit_attn=True)
            attn_all.append(attn)
        else:
            x = run_encoder_layer(x, layer["wqkv"], layer["wo"], bias,
                                  params["nheads"], emit_attn=False)

    x_cls = x[:, 0, :]                       # only the [CLS] token is DMA'd
    logits = run_classifier(x_cls, params["wc"], params["bc"])
    if return_attention:
        return logits, jnp.stack(attn_all, axis=1)   # torch.stack(attn, 1)
    return logits, None


def bert_distill_forward(teacher, student, input_ids, token_type_ids=None,
                         attention_mask=None, position_ids=None,
                         targets=None, alpha=0.5):
    """BertDistillModel.forward: returns (loss, student_logits).

    The reference stacks per-layer attention logits but get_loss never reads
    them, so we skip materializing the (B, L, NH, S, S) tensors entirely
    (pass return_attention=True to recover them).
    """
    # teacher under no_grad -> stop_gradient
    t_logits, _ = bert_forward(teacher, input_ids, token_type_ids,
                               attention_mask, position_ids,
                               return_attention=False)
    t_logits = lax.stop_gradient(t_logits)
    s_logits, _ = bert_forward(student, input_ids, token_type_ids,
                               attention_mask, position_ids,
                               return_attention=False)
    loss = run_distill_loss(s_logits, targets, t_logits, alpha)
    return loss, s_logits


# ----------------------------------------------------------------------------
if __name__ == "__main__":
    key = jax.random.PRNGKey(0)
    # NOTE: toy demo shapes; for real BERT sizes pick H, S, C as multiples of
    # 128 on the lane axis for dense (unmasked) vector stores.
    B, S, H, NH, C, V = 2, 8, 32, 2, 4, 32
    k_teacher, k_student, k_ids, k_tgt = jax.random.split(key, 4)

    teacher = init_bert_params(k_teacher, num_layers=3, vocab=V, max_seq=S,
                               hidden=H, nheads=NH, nclasses=C)
    student = init_bert_params(k_student, num_layers=2, vocab=V, max_seq=S,
                               hidden=H, nheads=NH, nclasses=C)

    input_ids = jax.random.randint(k_ids, (B, S), 0, V, dtype=jnp.int32)
    targets = jax.random.randint(k_tgt, (B,), 0, C, dtype=jnp.int32)

    loss, student_logits = bert_distill_forward(
        teacher, student, input_ids, targets=targets, alpha=0.5)
    jax.block_until_ready((loss, student_logits))
    assert student_logits.shape == (B, C)
    assert loss.shape == ()
    assert bool(jnp.isfinite(loss))
    print("KERNEL_OK")
</pallas_src>

<mosaic_0001>
module attributes {stable_mosaic.version = 11 : i64} {
  func.func @encoder_layer_kernel(%arg0: i32, %arg1: memref<1x8x32xbf16, #tpu.memory_space<vmem>>, %arg2: memref<32x96xbf16, #tpu.memory_space<vmem>>, %arg3: memref<32x32xbf16, #tpu.memory_space<vmem>>, %arg4: memref<1x1x8xf32, #tpu.memory_space<vmem>>, %arg5: memref<1x8x32xbf16, #tpu.memory_space<vmem>>) attributes {dimension_semantics = [#tpu.dimension_semantics<parallel>], iteration_bounds = array<i64: 2>, scalar_prefetch = 0 : i64, scratch_operands = 0 : i64, tpu.core_type = #tpu.core_type<tc>, window_params = [{transform_indices = @transform_0, window_bounds = array<i64: 1, 8, 32>}, {pipeline_mode = #tpu.pipeline_mode<synchronous>, transform_indices = @transform_1, window_bounds = array<i64: 32, 96>}, {pipeline_mode = #tpu.pipeline_mode<synchronous>, transform_indices = @transform_2, window_bounds = array<i64: 32, 32>}, {transform_indices = @transform_3, window_bounds = array<i64: 1, 1, 8>}, {transform_indices = @transform_4, window_bounds = array<i64: 1, 8, 32>}]} {
    %c0 = arith.constant 0 : index
    %c0_0 = arith.constant 0 : index
    %c0_1 = arith.constant 0 : index
    %0 = vector.load %arg1[%c0, %c0_0, %c0_1] : memref<1x8x32xbf16, #tpu.memory_space<vmem>>, vector<1x8x32xbf16>
    %1 = vector.shape_cast %0 : vector<1x8x32xbf16> to vector<8x32xbf16>
    %c0_2 = arith.constant 0 : index
    %c0_3 = arith.constant 0 : index
    %c0_4 = arith.constant 0 : index
    %2 = vector.load %arg4[%c0_2, %c0_3, %c0_4] : memref<1x1x8xf32, #tpu.memory_space<vmem>>, vector<1x1x8xf32>
    %3 = vector.shape_cast %2 : vector<1x1x8xf32> to vector<1x8xf32>
    %4 = vector.shape_cast %3 : vector<1x8xf32> to vector<1x1x8xf32>
    %c0_5 = arith.constant 0 : index
    %c0_6 = arith.constant 0 : index
    %5 = vector.load %arg2[%c0_5, %c0_6] : memref<32x96xbf16, #tpu.memory_space<vmem>>, vector<32x96xbf16>
    %cst = arith.constant dense<0.000000e+00> : vector<8x96xf32>
    %6 = tpu.matmul %1, %5, %cst {dimension_numbers = #tpu.dot_dimension_numbers<[1], [0], [0], [1], [0, 0, 1, 1], [], []>} : vector<8x32xbf16>, vector<32x96xbf16>, vector<8x96xf32> -> vector<8x96xf32>
    %7 = arith.truncf %6 : vector<8x96xf32> to vector<8x96xbf16>
    %8 = vector.extract_strided_slice %7 {offsets = [0, 0], sizes = [8, 32], strides = [1, 1]} : vector<8x96xbf16> to vector<8x32xbf16>
    %9 = vector.shape_cast %8 : vector<8x32xbf16> to vector<8x2x16xbf16>
    %10 = tpu.transpose %9, [1, 0, 2] : vector<8x2x16xbf16> -> vector<2x8x16xbf16>
    %11 = vector.extract_strided_slice %7 {offsets = [0, 32], sizes = [8, 32], strides = [1, 1]} : vector<8x96xbf16> to vector<8x32xbf16>
    %12 = vector.shape_cast %11 : vector<8x32xbf16> to vector<8x2x16xbf16>
    %13 = tpu.transpose %12, [1, 0, 2] : vector<8x2x16xbf16> -> vector<2x8x16xbf16>
    %14 = vector.extract_strided_slice %7 {offsets = [0, 64], sizes = [8, 32], strides = [1, 1]} : vector<8x96xbf16> to vector<8x32xbf16>
    %15 = vector.shape_cast %14 : vector<8x32xbf16> to vector<8x2x16xbf16>
    %16 = tpu.transpose %15, [1, 0, 2] : vector<8x2x16xbf16> -> vector<2x8x16xbf16>
    "tpu.trace_start"() <{level = 10 : i32, message = "nqd,nkd->nqk"}> : () -> ()
    %cst_7 = arith.constant dense<0.000000e+00> : vector<2x8x8xf32>
    %17 = tpu.matmul %10, %13, %cst_7 {dimension_numbers = #tpu.dot_dimension_numbers<[2], [2], [1], [1], [0, 0, 0, 1, 1, 1], [0], [0]>} : vector<2x8x16xbf16>, vector<2x8x16xbf16>, vector<2x8x8xf32> -> vector<2x8x8xf32>
    "tpu.trace_stop"() : () -> ()
    %cst_8 = arith.constant 2.500000e-01 : f32
    %18 = vector.broadcast %cst_8 : f32 to vector<2x8x8xf32>
    %19 = arith.mulf %17, %18 : vector<2x8x8xf32>
    %20 = vector.broadcast %4 : vector<1x1x8xf32> to vector<2x8x8xf32>
    %21 = arith.addf %19, %20 : vector<2x8x8xf32>
    %cst_9 = arith.constant dense<0xFF800000> : vector<2x8xf32>
    %22 = vector.multi_reduction <maximumf>, %21, %cst_9 [2] : vector<2x8x8xf32> to vector<2x8xf32>
    %23 = vector.shape_cast %22 : vector<2x8xf32> to vector<2x8x1xf32>
    %24 = vector.broadcast %23 : vector<2x8x1xf32> to vector<2x8x8xf32>
    %25 = arith.subf %21, %24 : vector<2x8x8xf32>
    %26 = math.exp %25 : vector<2x8x8xf32>
    %cst_10 = arith.constant dense<0.000000e+00> : vector<2x8xf32>
    %27 = vector.multi_reduction <add>, %26, %cst_10 [2] : vector<2x8x8xf32> to vector<2x8xf32>
    %28 = vector.shape_cast %27 : vector<2x8xf32> to vector<2x8x1xf32>
    %29 = tpu.reciprocal %28 {approx = true} : vector<2x8x1xf32> -> vector<2x8x1xf32>
    %30 = vector.broadcast %29 : vector<2x8x1xf32> to vector<2x8x8xf32>
    %31 = arith.mulf %26, %30 : vector<2x8x8xf32>
    %32 = arith.truncf %31 : vector<2x8x8xf32> to vector<2x8x8xbf16>
    "tpu.trace_start"() <{level = 10 : i32, message = "nqk,nkd->nqd"}> : () -> ()
    %cst_11 = arith.constant dense<0.000000e+00> : vector<2x8x16xf32>
    %33 = tpu.matmul %32, %16, %cst_11 {dimension_numbers = #tpu.dot_dimension_numbers<[2], [1], [1], [2], [0, 0, 0, 1, 1, 2], [0], [0]>} : vector<2x8x8xbf16>, vector<2x8x16xbf16>, vector<2x8x16xf32> -> vector<2x8x16xf32>
    "tpu.trace_stop"() : () -> ()
    %34 = tpu.transpose %33, [1, 0, 2] : vector<2x8x16xf32> -> vector<8x2x16xf32>
    %35 = vector.shape_cast %34 : vector<8x2x16xf32> to vector<8x32xf32>
    %36 = arith.truncf %35 : vector<8x32xf32> to vector<8x32xbf16>
    %c0_12 = arith.constant 0 : index
    %c0_13 = arith.constant 0 : index
    %37 = vector.load %arg3[%c0_12, %c0_13] : memref<32x32xbf16, #tpu.memory_space<vmem>>, vector<32x32xbf16>
    %cst_14 = arith.constant dense<0.000000e+00> : vector<8x32xf32>
    %38 = tpu.matmul %36, %37, %cst_14 {dimension_numbers = #tpu.dot_dimension_numbers<[1], [0], [0], [1], [0, 0, 1, 1], [], []>} : vector<8x32xbf16>, vector<32x32xbf16>, vector<8x32xf32> -> vector<8x32xf32>
    %39 = arith.extf %1 : vector<8x32xbf16> to vector<8x32xf32>
    %40 = arith.addf %39, %38 : vector<8x32xf32>
    %41 = arith.truncf %40 : vector<8x32xf32> to vector<8x32xbf16>
    %c0_15 = arith.constant 0 : index
    %c0_16 = arith.constant 0 : index
    %c0_17 = arith.constant 0 : index
    %42 = vector.load %arg5[%c0_15, %c0_16, %c0_17] : memref<1x8x32xbf16, #tpu.memory_space<vmem>>, vector<1x8x32xbf16>
    %43 = vector.shape_cast %42 : vector<1x8x32xbf16> to vector<8x32xbf16>
    %44 = vector.shape_cast %41 : vector<8x32xbf16> to vector<1x8x32xbf16>
    tpu.vector_store %arg5[%c0_15, %c0_16, %c0_17], %44 {strides = array<i32>} : memref<1x8x32xbf16, #tpu.memory_space<vmem>>, vector<1x8x32xbf16>,
    return
  }
  func.func @transform_0(%arg0: i32) -> (i32, i32, i32) {
    %c0_i32 = arith.constant 0 : i32
    %c0_i32_0 = arith.constant 0 : i32
    %c0_i32_1 = arith.constant 0 : i32
    return %arg0, %c0_i32, %c0_i32_0 : i32, i32, i32
  }
  func.func @transform_1(%arg0: i32) -> (i32, i32) {
    %c0_i32 = arith.constant 0 : i32
    %c0_i32_0 = arith.constant 0 : i32
    %c0_i32_1 = arith.constant 0 : i32
    return %c0_i32, %c0_i32_0 : i32, i32
  }
  func.func @transform_2(%arg0: i32) -> (i32, i32) {
    %c0_i32 = arith.constant 0 : i32
    %c0_i32_0 = arith.constant 0 : i32
    %c0_i32_1 = arith.constant 0 : i32
    return %c0_i32, %c0_i32_0 : i32, i32
  }
  func.func @transform_3(%arg0: i32) -> (i32, i32, i32) {
    %c0_i32 = arith.constant 0 : i32
    %c0_i32_0 = arith.constant 0 : i32
    %c0_i32_1 = arith.constant 0 : i32
    return %arg0, %c0_i32, %c0_i32_0 : i32, i32, i32
  }
  func.func @transform_4(%arg0: i32) -> (i32, i32, i32) {
    %c0_i32 = arith.constant 0 : i32
    %c0_i32_0 = arith.constant 0 : i32
    %c0_i32_1 = arith.constant 0 : i32
    return %arg0, %c0_i32, %c0_i32_0 : i32, i32, i32
  }
}

</mosaic_0001>

<llo_original>
// kernel: tpu_custom_call.1
$region0: #{tpu_custom_call.1}
  #allocation0 [shape = 'u32[]', space=smem, size = 0x4, offset = 0x4, fixed_abs, tag = 'smem constant byte address 0x4 - core index']
  #allocation1 [shape = 'u32[144,128]{1,0:T(1,128)}', space=vmem, size = 0x12000, scoped, tag = 'internal scratch']
  %s0 = inlined_call_operand.hbm [shape: bf16[2,8,32], index: 0, kind: input, shape index: {}]
  %s1 = inlined_call_operand.hbm [shape: bf16[32,96], index: 1, kind: input, shape index: {}]
  %s2 = inlined_call_operand.hbm [shape: bf16[32,32], index: 2, kind: input, shape index: {}]
  %s3 = inlined_call_operand.vmem [shape: f32[2,1,8], index: 3, kind: input, shape index: {}]
  %s4 = inlined_call_operand.hbm [shape: bf16[2,8,32], index: 4, kind: output, shape index: {}]
  %s5 = sld [smem:[#allocation0]]
  $region61: #{tpu_custom_call.1} parent=0
    _
  %s7 = ssub.s32 1, %s5
  %s8 = scalar_select 0, %s7, %s5
  $region1: #{tpu_custom_call.1} parent=0
    #allocation2 [shape = 'u8[4096]{0}', space=vmem, size = 0x1000, scoped, tag = 'input window, operand 0']
    #allocation3 [shape = 's32[2]{0}', space=sflag, size = 0x8, scoped, tag = 'scoped memory for tpu_custom_call.1']
    #allocation4 [shape = 's32[2]{0}', space=sflag, size = 0x8, scoped, tag = 'scoped memory for tpu_custom_call.1']
    #allocation5 [shape = 'u8[8192]{0}', space=vmem, size = 0x2000, scoped, tag = 'input window, operand 1, single buffered']
    #allocation6 [shape = 's32[1]{0}', space=sflag, size = 0x4, scoped, tag = 'scoped memory for tpu_custom_call.1']
    #allocation7 [shape = 'u8[8192]{0}', space=vmem, size = 0x2000, scoped, tag = 'input window, operand 2, single buffered']
    #allocation8 [shape = 'u8[4096]{0}', space=vmem, size = 0x1000, scoped, tag = 'output window, operand 0']
    %9 = vsyncpa [#allocation3], 0
    %s10 = scalar_lea.sflag [#allocation3], 1
    %11 = vsyncpa %s10, 0
    %12 = vsyncpa [#allocation6], 0
    %13 = vsyncpa [#allocation4], 0
    %s14 = scalar_lea.sflag [#allocation4], 1
    %15 = vsyncpa %s14, 0
    loop: start=0, step=1, limit=4
    $region2: #{tpu_custom_call.1} parent=1 // loop_pre_header
      _
    $region3: #{tpu_custom_call.1} parent=1 // loop_header
      %s17 = sphi 0, %s21
      %p18 = scmp.ge.s32.totalorder %s17, 4
      %s27 = sphi 0, %s29
      %s30 = sphi 0, %s27
      %s31 = sphi 0, %s30
      %s47 = sphi 0, %s31
      %s51 = sphi 0, %s51
      %s53 = sphi 0, %s51
      %s54 = sphi 0, %s53
      %s68 = sphi 0, %s54
      %s72 = sphi 0, %s72
      %s74 = sphi 0, %s72
      %s75 = sphi 0, %s74
      %s89 = sphi 0, %s75
      %s95 = sphi 0, %s97
      %s98 = sphi 0, %s95
      %s99 = sphi 0, %s98
      %s115 = sphi 0, %s99
      %s121 = sphi 0, %s123
      %s124 = sphi 0, %s121
      %s125 = sphi 0, %s124
      %s141 = sphi 0, %s125
    $region4: #{tpu_custom_call.1} parent=1 // loop_header_branch
      %20 = sbr.rel (%p18) target = $region8
    $region5: #{tpu_custom_call.1} parent=1 // loop_body
      %s22 = ssub.s32 %s17, 1
      %s23 = ssub.s32 %s17, 2
      %s24 = sadd.s32 %s17, 1
      %s25 = ssub.s32 %s17, %s24
      %p26 = scmp.eq.s32.totalorder %s25, 0
      %s28 = sadd.s32 %s27, 1
      %s29 = scalar_select %p26, %s27, %s28
      %p32 = pneg %p26
      %p33 = scmp.eq.s32.totalorder %s17, 1
      %p34 = por %p32, %p33
      %p35 = scmp.ne.s32.totalorder %s27, %s30
      %p36 = scmp.eq.s32.totalorder %s17, 0
      %p37 = por %p35, %p36
      %p38 = scmp.ne.s32.totalorder %s27, %s30
      %p39 = scmp.eq.s32.totalorder %s22, 1
      %p40 = por %p38, %p39
      %p41 = scmp.ne.s32.totalorder %s30, %s31
      %p42 = scmp.eq.s32.totalorder %s22, 0
      %p43 = por %p41, %p42
      %p44 = scmp.ne.s32.totalorder %s30, %s31
      %p45 = scmp.eq.s32.totalorder %s23, 1
      %p46 = por %p44, %p45
      %p48 = scmp.ne.s32.totalorder %s31, %s47
      %p49 = scmp.eq.s32.totalorder %s23, 0
      %p50 = por %p48, %p49
      %s52 = sadd.s32 %s51, 1
      %p55 = scmp.eq.s32.totalorder %s17, 1
      %p56 = scmp.ne.s32.totalorder %s51, %s53
      %p57 = scmp.eq.s32.totalorder %s17, 0
      %p58 = por %p56, %p57
      %p59 = scmp.ne.s32.totalorder %s51, %s53
      %p60 = scmp.eq.s32.totalorder %s22, 1
      %p61 = por %p59, %p60
      %p62 = scmp.ne.s32.totalorder %s53, %s54
      %p63 = scmp.eq.s32.totalorder %s22, 0
      %p64 = por %p62, %p63
      %p65 = scmp.ne.s32.totalorder %s53, %s54
      %p66 = scmp.eq.s32.totalorder %s23, 1
      %p67 = por %p65, %p66
      %p69 = scmp.ne.s32.totalorder %s54, %s68
      %p70 = scmp.eq.s32.totalorder %s23, 0
      %p71 = por %p69, %p70
      %s73 = sadd.s32 %s72, 1
      %p76 = scmp.eq.s32.totalorder %s17, 1
      %p77 = scmp.ne.s32.totalorder %s72, %s74
      %p78 = scmp.eq.s32.totalorder %s17, 0
      %p79 = por %p77, %p78
      %p80 = scmp.ne.s32.totalorder %s72, %s74
      %p81 = scmp.eq.s32.totalorder %s22, 1
      %p82 = por %p80, %p81
      %p83 = scmp.ne.s32.totalorder %s74, %s75
      %p84 = scmp.eq.s32.totalorder %s22, 0
      %p85 = por %p83, %p84
      %p86 = scmp.ne.s32.totalorder %s74, %s75
      %p87 = scmp.eq.s32.totalorder %s23, 1
      %p88 = por %p86, %p87
      %p90 = scmp.ne.s32.totalorder %s75, %s89
      %p91 = scmp.eq.s32.totalorder %s23, 0
      %p92 = por %p90, %p91
      %s93 = ssub.s32 %s17, %s24
      %p94 = scmp.eq.s32.totalorder %s93, 0
      %s96 = sadd.s32 %s95, 1
      %s97 = scalar_select %p94, %s95, %s96
      %p100 = pneg %p94
      %p101 = scmp.eq.s32.totalorder %s17, 1
      %p102 = por %p100, %p101
      %p103 = scmp.ne.s32.totalorder %s95, %s98
      %p104 = scmp.eq.s32.totalorder %s17, 0
      %p105 = por %p103, %p104
      %p106 = scmp.ne.s32.totalorder %s95, %s98
      %p107 = scmp.eq.s32.totalorder %s22, 1
      %p108 = por %p106, %p107
      %p109 = scmp.ne.s32.totalorder %s98, %s99
      %p110 = scmp.eq.s32.totalorder %s22, 0
      %p111 = por %p109, %p110
      %p112 = scmp.ne.s32.totalorder %s98, %s99
      %p113 = scmp.eq.s32.totalorder %s23, 1
      %p114 = por %p112, %p113
      %p116 = scmp.ne.s32.totalorder %s99, %s115
      %p117 = scmp.eq.s32.totalorder %s23, 0
      %p118 = por %p116, %p117
      %s119 = ssub.s32 %s17, %s24
      %p120 = scmp.eq.s32.totalorder %s119, 0
      %s122 = sadd.s32 %s121, 1
      %s123 = scalar_select %p120, %s121, %s122
      %p126 = pneg %p120
      %p127 = scmp.eq.s32.totalorder %s17, 1
      %p128 = por %p126, %p127
      %p129 = scmp.ne.s32.totalorder %s121, %s124
      %p130 = scmp.eq.s32.totalorder %s17, 0
      %p131 = por %p129, %p130
      %p132 = scmp.ne.s32.totalorder %s121, %s124
      %p133 = scmp.eq.s32.totalorder %s22, 1
      %p134 = por %p132, %p133
      %p135 = scmp.ne.s32.totalorder %s124, %s125
      %p136 = scmp.eq.s32.totalorder %s22, 0
      %p137 = por %p135, %p136
      %p138 = scmp.ne.s32.totalorder %s124, %s125
      %p139 = scmp.eq.s32.totalorder %s23, 1
      %p140 = por %p138, %p139
      %p142 = scmp.ne.s32.totalorder %s125, %s141
      %p143 = scmp.eq.s32.totalorder %s23, 0
      %p144 = por %p142, %p143
      %p145 = scmp.le.s32.totalorder 1, %s17
      %p146 = scmp.lt.s32.totalorder %s17, 3
      %p147 = pnand %p145, %p146
      %p148 = pneg %p147
      // Predicated region
      $region9: #{tpu_custom_call.1} parent=5 // pred_check
        _
      $region10: #{tpu_custom_call.1} parent=5 // pred_check_branch
        %150 = sbr.rel (%p147) target = $region12
      $region11: #{tpu_custom_call.1} parent=5 // pred_region
        %s151 = ssub.s32 %s17, 1
        // Predicated region
        $region13: #{tpu_custom_call.1} parent=11 // pred_check
          %p152 = pneg %p64
        $region14: #{tpu_custom_call.1} parent=11 // pred_check_branch
          %154 = sbr.rel (%p152) target = $region16
        $region15: #{tpu_custom_call.1} parent=11 // pred_region
          %s156 = ssub.s32 256, 256
          %157 = vsyncadd [#allocation6], %s156
          %s158 = sshll.u32 [#allocation5], 4
          %s159 = int_to_ptr.vmem [resolvable:$true] %s158
          %164 = dma.hbm_to_vmem [thread:$0]  %s1, 256, %s159, [#allocation6], 64, 64, 4
        $region16: #{tpu_custom_call.1} parent=11 // pred_fallthru
          _
        // Predicated region
        $region17: #{tpu_custom_call.1} parent=11 // pred_check
          %p165 = pneg %p85
        $region18: #{tpu_custom_call.1} parent=11 // pred_check_branch
          %167 = sbr.rel (%p165) target = $region20
        $region19: #{tpu_custom_call.1} parent=11 // pred_region
          %s169 = ssub.s32 256, 256
          %170 = vsyncadd [#allocation6], %s169
          %s171 = sshll.u32 [#allocation7], 4
          %s172 = int_to_ptr.vmem [resolvable:$true] %s171
          %177 = dma.hbm_to_vmem [thread:$0]  %s2, 256, %s172, [#allocation6], 64, 64, 4
        $region20: #{tpu_custom_call.1} parent=11 // pred_fallthru
          _
      $region12: #{tpu_custom_call.1} parent=5 // pred_fallthru
        _
      %p178 = scmp.lt.s32.totalorder %s17, 2
      // Predicated region
      $region21: #{tpu_custom_call.1} parent=5 // pred_check
        %p179 = pneg %p178
      $region22: #{tpu_custom_call.1} parent=5 // pred_check_branch
        %181 = sbr.rel (%p179) target = $region24
      $region23: #{tpu_custom_call.1} parent=5 // pred_region
        // Predicated region
        $region25: #{tpu_custom_call.1} parent=23 // pred_check
          %p182 = pneg %p37
        $region26: #{tpu_custom_call.1} parent=23 // pred_check_branch
          %184 = sbr.rel (%p182) target = $region28
        $region27: #{tpu_custom_call.1} parent=23 // pred_region
          %s185 = sand.u32 %s27, 1
          %s186 = scalar_lea.sflag [#allocation3], %s185
          %s187 = sand.u32 %s27, 1
          %s188 = smul.addr %s187, 4
          %s189 = scalar_lea.vmem [#allocation2], %s188
          %s191 = ssub.s32 64, 64
          %192 = vsyncadd %s186, %s191
          %s193 = smul.addr %s17, 64
          %s194 = scalar_lea.hbm %s0, %s193
          %s196 = sshll.u32 %s189, 4
          %s197 = int_to_ptr.vmem [resolvable:$true] %s196
          %199 = dma.hbm_to_vmem [thread:$0]  %s194, 64, %s197, %s186
        $region28: #{tpu_custom_call.1} parent=23 // pred_fallthru
          _
        // Predicated region
        $region29: #{tpu_custom_call.1} parent=23 // pred_check
          %p200 = pneg %p105
        $region30: #{tpu_custom_call.1} parent=23 // pred_check_branch
          %202 = sbr.rel (%p200) target = $region32
        $region31: #{tpu_custom_call.1} parent=23 // pred_region
          %p203 = scmp.lt.s32.totalorder %s17, 1
          %s204 = scalar_select %p203, %s17, 1
          %s205 = scalar_lea.vmem %s3, %s204
        $region32: #{tpu_custom_call.1} parent=23 // pred_fallthru
          _
      $region24: #{tpu_custom_call.1} parent=5 // pred_fallthru
        _
      %p206 = scmp.le.s32.totalorder 1, %s17
      %p207 = scmp.lt.s32.totalorder %s17, 3
      %p208 = pnand %p206, %p207
      %p209 = pneg %p208
      // Predicated region
      $region33: #{tpu_custom_call.1} parent=5 // pred_check
        _
      $region34: #{tpu_custom_call.1} parent=5 // pred_check_branch
        %211 = sbr.rel (%p208) target = $region36
      $region35: #{tpu_custom_call.1} parent=5 // pred_region
        %s212 = ssub.s32 %s17, 1
        %s213 = sand.u32 %s30, 1
        %s214 = scalar_lea.sflag [#allocation3], %s213
        %s215 = sand.u32 %s30, 1
        %s216 = smul.addr %s215, 4
        %s217 = scalar_lea.vmem [#allocation2], %s216
        // Predicated region
        $region37: #{tpu_custom_call.1} parent=35 // pred_check
          %p218 = pneg %p43
        $region38: #{tpu_custom_call.1} parent=35 // pred_check_branch
          %220 = sbr.rel (%p218) target = $region40
        $region39: #{tpu_custom_call.1} parent=35 // pred_region
          %221 = dma.done %s214, 64
        $region40: #{tpu_custom_call.1} parent=35 // pred_fallthru
          _
        // Predicated region
        $region41: #{tpu_custom_call.1} parent=35 // pred_check
          %p222 = pneg %p64
        $region42: #{tpu_custom_call.1} parent=35 // pred_check_branch
          %224 = sbr.rel (%p222) target = $region44
        $region43: #{tpu_custom_call.1} parent=35 // pred_region
          %225 = dma.done [#allocation6], 256
        $region44: #{tpu_custom_call.1} parent=35 // pred_fallthru
          _
        // Predicated region
        $region45: #{tpu_custom_call.1} parent=35 // pred_check
          %p226 = pneg %p85
        $region46: #{tpu_custom_call.1} parent=35 // pred_check_branch
          %228 = sbr.rel (%p226) target = $region48
        $region47: #{tpu_custom_call.1} parent=35 // pred_region
          %229 = dma.done [#allocation6], 256
        $region48: #{tpu_custom_call.1} parent=35 // pred_fallthru
          _
        %s230 = sand.u32 %s30, 1
        %s231 = scalar_lea.sflag [#allocation3], %s230
        %s232 = sand.u32 %s30, 1
        %s233 = smul.addr %s232, 4
        %s234 = scalar_lea.vmem [#allocation2], %s233
        %p235 = pneg %p43
        %p236 = pneg %p40
        %p237 = pneg %p64
        %p238 = pneg %p61
        %p239 = pneg %p85
        %p240 = pneg %p82
        %p241 = scmp.lt.s32.totalorder %s22, 1
        %s242 = scalar_select %p241, %s22, 1
        %s243 = scalar_lea.vmem %s3, %s242
        %p244 = pneg %p111
        %p245 = pneg %p108
        %p246 = pneg %p137
        %p247 = pneg %p134
        %s248 = sand.u32 %s124, 1
        %s249 = scalar_lea.sflag [#allocation4], %s248
        %s250 = sand.u32 %s124, 1
        %s251 = smul.addr %s250, 4
        %s252 = scalar_lea.vmem [#allocation8], %s251
        %p253 = scmp.lt.s32.totalorder %s22, 1
        %s254 = scalar_select %p253, %s22, 1
        %s255 = scalar_lea.vmem %s3, %s254
        %v257 = vld [vmem:[%s217] sm:$0xf]
        %v258 = vld [vmem:[%s255] sm:$0x1]
        %v259 = vld [vmem:[#allocation5] sm:$0xf]
        %v260 = vld [vmem:[#allocation5 + $0x4] sm:$0xf]
        %v261 = vld [vmem:[#allocation5 + $0x8] sm:$0xf]
        %v262 = vld [vmem:[#allocation5 + $0xc] sm:$0xf]
        %v267 = vunpack.c.l.b16 %v259
        %v268 = vunpack.c.l.b16 %v260
        %v269 = vunpack.c.l.b16 %v261
        %v270 = vunpack.c.l.b16 %v262
        %v271 = vpack.c.b16 %v268, %v267
        %v272 = vpack.c.b16 %v270, %v269
        %vm275 = vcmask 261120
        %v277 = vsel %vm275, %v257, 0
        %279 = vmatprep.subr.bf16.mxu0 0
        %280 = vmatpush1.bf16.msra.mxu0 0
        %281 = vmatprep.subr.bf16.mxu0 0
        %282 = vmatpush1.bf16.msra.mxu0 0
        %283 = vmatprep.subr.bf16.mxu0 0
        %284 = vmatpush1.bf16.msra.mxu0 0
        %285 = vmatprep.subr.bf16.mxu0 0
        %286 = vmatpush1.bf16.msra.mxu0 0
        %287 = vmatprep.subr.bf16.mxu0 0
        %288 = vmatpush1.bf16.msra.mxu0 0
        %289 = vmatprep.subr.bf16.mxu0 0
        %290 = vmatpush1.bf16.msra.mxu0 0
        %291 = vmatprep.subr.bf16.mxu0 0
        %292 = vmatpush1.bf16.msra.mxu0 %v272
        %293 = vmatprep.subr.bf16.mxu0 0
        %294 = vmatpush1.bf16.msra.mxu0 %v271
        %295 = vmatprep.subr.bf16.mxu0 0
        %296 = vmatpush2.bf16.msra.mxu0 0
        %297 = vmatprep.subr.bf16.mxu0 0
        %298 = vmatpush2.bf16.msra.mxu0 0
        %299 = vmatprep.subr.bf16.mxu0 0
        %300 = vmatpush2.bf16.msra.mxu0 0
        %301 = vmatprep.subr.bf16.mxu0 0
        %302 = vmatpush2.bf16.msra.mxu0 0
        %303 = vmatprep.subr.bf16.mxu0 0
        %304 = vmatpush2.bf16.msra.mxu0 0
        %305 = vmatprep.subr.bf16.mxu0 0
        %306 = vmatpush2.bf16.msra.mxu0 0
        %307 = vmatprep.subr.bf16.mxu0 0
        %308 = vmatpush2.bf16.msra.mxu0 0
        %309 = vmatprep.subr.bf16.mxu0 0
        %310 = vmatpush2.bf16.msra.mxu0 0
        %311 = vmatprep.mubr.bf16.mxu0 0
        %312 = vmatmul.mubr.bf16.gmra.mxu0 %v277
        %v313 = vpop.f32.mrf.mxu0
        %v314 = vadd.f32 0.0, %v313
        %v315 = vpop.f32.mrf.mxu0
        %v316 = vpop.f32.mrf.mxu0
        %v317 = vpop.f32.mrf.mxu0
        %318 = vdwg.mxu0
        %v319 = vpack.c.bf16 %v314, %v314
        %321 = vrot.lane.b32.xlu0 %v319, 112
        %v322 = vpop.permute.xlu0 %321
        %v324 = vunpack.c.l.s4 1983009808
        %v325 = vunpack.c.0.s8 %v324
        %v326 = vlaneseq
        %v327 = vshrl.u32 %v326, 7
        %v328 = vsub.s32 %v325, %v327
        %v329 = vrot.slane %v319, %v328
        %v330 = vcombine.high %v329, 0
        %v332 = vunpack.c.l.s4 1934713408
        %v333 = vunpack.c.0.s8 %v332
        %v334 = vlaneseq
        %v335 = vshrl.u32 %v334, 7
        %v336 = vsub.s32 %v333, %v335
        %v337 = vrot.slane %v329, %v336
        %v339 = vunpack.c.l.s4 1934713408
        %v340 = vunpack.c.0.s8 %v339
        %v341 = vlaneseq
        %v342 = vshrl.u32 %v341, 7
        %v343 = vsub.s32 %v340, %v342
        %v344 = vrot.slane %v330, %v343
        %v345 = vcombine.high %v337, 0
        %v346 = vcombine.high %v344, 0
        %v349 = vunpack.c.l.s4 1983009808
        %v350 = vunpack.c.0.s8 %v349
        %v351 = vlaneseq
        %v352 = vshrl.u32 %v351, 7
        %v353 = vsub.s32 %v350, %v352
        %v354 = vrot.slane %v322, %v353
        %v355 = vcombine.high %v354, 0
        %v357 = vunpack.c.l.s4 1934713408
        %v358 = vunpack.c.0.s8 %v357
        %v359 = vlaneseq
        %v360 = vshrl.u32 %v359, 7
        %v361 = vsub.s32 %v358, %v360
        %v362 = vrot.slane %v354, %v361
        %v364 = vunpack.c.l.s4 1934713408
        %v365 = vunpack.c.0.s8 %v364
        %v366 = vlaneseq
        %v367 = vshrl.u32 %v366, 7
        %v368 = vsub.s32 %v365, %v367
        %v369 = vrot.slane %v355, %v368
        %v370 = vcombine.high %v362, 0
        %v371 = vcombine.high %v369, 0
        %v374 = vpack.i.b16 %v362, %v337
        %v376 = vshrl.u32 %v337, 16
        %v377 = vshrl.u32 %v362, 16
        %v378 = vpack.i.b16 %v377, %v376
        %v382 = vpack.i.b16 %v370, %v345
        %v384 = vshrl.u32 %v345, 16
        %v385 = vshrl.u32 %v370, 16
        %v386 = vpack.i.b16 %v385, %v384
        %v390 = vpack.i.b16 %v369, %v344
        %v392 = vshrl.u32 %v344, 16
        %v393 = vshrl.u32 %v369, 16
        %v394 = vpack.i.b16 %v393, %v392
        %v398 = vpack.i.b16 %v371, %v346
        %v400 = vshrl.u32 %v346, 16
        %v401 = vshrl.u32 %v371, 16
        %v402 = vpack.i.b16 %v401, %v400
        %v404 = vcombine.low %v374, %v390
        %v406 = vunpack.c.l.s4 1983009808
        %v407 = vunpack.c.0.s8 %v406
        %v408 = vlaneseq
        %v409 = vshrl.u32 %v408, 7
        %v410 = vsub.s32 %v407, %v409
        %v411 = vrot.slane %v404, %v410
        %v412 = vcombine.low %v382, %v398
        %v414 = vunpack.c.l.s4 1983009808
        %v415 = vunpack.c.0.s8 %v414
        %v416 = vlaneseq
        %v417 = vshrl.u32 %v416, 7
        %v418 = vsub.s32 %v415, %v417
        %v419 = vrot.slane %v412, %v418
        %v420 = vcombine.low %v411, %v419
        %v422 = vunpack.c.l.s4 1934713408
        %v423 = vunpack.c.0.s8 %v422
        %v424 = vlaneseq
        %v425 = vshrl.u32 %v424, 7
        %v426 = vsub.s32 %v423, %v425
        %v427 = vrot.slane %v420, %v426
        %v428 = vcombine.low %v378, %v394
        %v430 = vunpack.c.l.s4 1983009808
        %v431 = vunpack.c.0.s8 %v430
        %v432 = vlaneseq
        %v433 = vshrl.u32 %v432, 7
        %v434 = vsub.s32 %v431, %v433
        %v435 = vrot.slane %v428, %v434
        %v436 = vcombine.low %v386, %v402
        %v438 = vunpack.c.l.s4 1983009808
        %v439 = vunpack.c.0.s8 %v438
        %v440 = vlaneseq
        %v441 = vshrl.u32 %v440, 7
        %v442 = vsub.s32 %v439, %v441
        %v443 = vrot.slane %v436, %v442
        %v444 = vcombine.low %v435, %v443
        %v446 = vunpack.c.l.s4 1934713408
        %v447 = vunpack.c.0.s8 %v446
        %v448 = vlaneseq
        %v449 = vshrl.u32 %v448, 7
        %v450 = vsub.s32 %v447, %v449
        %v451 = vrot.slane %v444, %v450
        %v454 = vpack.i.b16 %v451, %v427
        %v455 = vshrl.u32 %v427, 16
        %v456 = vshrl.u32 %v451, 16
        %v457 = vpack.i.b16 %v456, %v455
        %458 = vrot.lane.b32.xlu0 %v319, 96
        %v459 = vpop.permute.xlu0 %458
        %460 = vrot.lane.b32.xlu0 %v322, 96
        %v461 = vpop.permute.xlu0 %460
        %v464 = vunpack.c.l.s4 1983009808
        %v465 = vunpack.c.0.s8 %v464
        %v466 = vlaneseq
        %v467 = vshrl.u32 %v466, 7
        %v468 = vsub.s32 %v465, %v467
        %v469 = vrot.slane %v459, %v468
        %v470 = vcombine.high %v469, 0
        %v472 = vunpack.c.l.s4 1934713408
        %v473 = vunpack.c.0.s8 %v472
        %v474 = vlaneseq
        %v475 = vshrl.u32 %v474, 7
        %v476 = vsub.s32 %v473, %v475
        %v477 = vrot.slane %v469, %v476
        %v479 = vunpack.c.l.s4 1934713408
        %v480 = vunpack.c.0.s8 %v479
        %v481 = vlaneseq
        %v482 = vshrl.u32 %v481, 7
        %v483 = vsub.s32 %v480, %v482
        %v484 = vrot.slane %v470, %v483
        %v485 = vcombine.high %v477, 0
        %v486 = vcombine.high %v484, 0
        %v489 = vunpack.c.l.s4 1983009808
        %v490 = vunpack.c.0.s8 %v489
        %v491 = vlaneseq
        %v492 = vshrl.u32 %v491, 7
        %v493 = vsub.s32 %v490, %v492
        %v494 = vrot.slane %v461, %v493
        %v495 = vcombine.high %v494, 0
        %v497 = vunpack.c.l.s4 1934713408
        %v498 = vunpack.c.0.s8 %v497
        %v499 = vlaneseq
        %v500 = vshrl.u32 %v499, 7
        %v501 = vsub.s32 %v498, %v500
        %v502 = vrot.slane %v494, %v501
        %v504 = vunpack.c.l.s4 1934713408
        %v505 = vunpack.c.0.s8 %v504
        %v506 = vlaneseq
        %v507 = vshrl.u32 %v506, 7
        %v508 = vsub.s32 %v505, %v507
        %v509 = vrot.slane %v495, %v508
        %v510 = vcombine.high %v502, 0
        %v511 = vcombine.high %v509, 0
        %v514 = vpack.i.b16 %v502, %v477
        %v516 = vshrl.u32 %v477, 16
        %v517 = vshrl.u32 %v502, 16
        %v518 = vpack.i.b16 %v517, %v516
        %v522 = vpack.i.b16 %v510, %v485
        %v524 = vshrl.u32 %v485, 16
        %v525 = vshrl.u32 %v510, 16
        %v526 = vpack.i.b16 %v525, %v524
        %v530 = vpack.i.b16 %v509, %v484
        %v532 = vshrl.u32 %v484, 16
        %v533 = vshrl.u32 %v509, 16
        %v534 = vpack.i.b16 %v533, %v532
        %v538 = vpack.i.b16 %v511, %v486
        %v540 = vshrl.u32 %v486, 16
        %v541 = vshrl.u32 %v511, 16
        %v542 = vpack.i.b16 %v541, %v540
        %v544 = vcombine.low %v514, %v530
        %v546 = vunpack.c.l.s4 1983009808
        %v547 = vunpack.c.0.s8 %v546
        %v548 = vlaneseq
        %v549 = vshrl.u32 %v548, 7
        %v550 = vsub.s32 %v547, %v549
        %v551 = vrot.slane %v544, %v550
        %v552 = vcombine.low %v522, %v538
        %v554 = vunpack.c.l.s4 1983009808
        %v555 = vunpack.c.0.s8 %v554
        %v556 = vlaneseq
        %v557 = vshrl.u32 %v556, 7
        %v558 = vsub.s32 %v555, %v557
        %v559 = vrot.slane %v552, %v558
        %v560 = vcombine.low %v551, %v559
        %v562 = vunpack.c.l.s4 1934713408
        %v563 = vunpack.c.0.s8 %v562
        %v564 = vlaneseq
        %v565 = vshrl.u32 %v564, 7
        %v566 = vsub.s32 %v563, %v565
        %v567 = vrot.slane %v560, %v566
        %v568 = vcombine.low %v518, %v534
        %v570 = vunpack.c.l.s4 1983009808
        %v571 = vunpack.c.0.s8 %v570
        %v572 = vlaneseq
        %v573 = vshrl.u32 %v572, 7
        %v574 = vsub.s32 %v571, %v573
        %v575 = vrot.slane %v568, %v574
        %v576 = vcombine.low %v526, %v542
        %v578 = vunpack.c.l.s4 1983009808
        %v579 = vunpack.c.0.s8 %v578
        %v580 = vlaneseq
        %v581 = vshrl.u32 %v580, 7
        %v582 = vsub.s32 %v579, %v581
        %v583 = vrot.slane %v576, %v582
        %v584 = vcombine.low %v575, %v583
        %v586 = vunpack.c.l.s4 1934713408
        %v587 = vunpack.c.0.s8 %v586
        %v588 = vlaneseq
        %v589 = vshrl.u32 %v588, 7
        %v590 = vsub.s32 %v587, %v589
        %v591 = vrot.slane %v584, %v590
        %v594 = vpack.i.b16 %v591, %v567
        %v595 = vshrl.u32 %v567, 16
        %v596 = vshrl.u32 %v591, 16
        %v597 = vpack.i.b16 %v596, %v595
        %598 = vrot.lane.b32.xlu0 %v319, 64
        %v599 = vpop.permute.xlu0 %598
        %600 = vrot.lane.b32.xlu0 %v322, 64
        %v601 = vpop.permute.xlu0 %600
        %v604 = vunpack.c.l.s4 1983009808
        %v605 = vunpack.c.0.s8 %v604
        %v606 = vlaneseq
        %v607 = vshrl.u32 %v606, 7
        %v608 = vsub.s32 %v605, %v607
        %v609 = vrot.slane %v599, %v608
        %v610 = vcombine.high %v609, 0
        %v612 = vunpack.c.l.s4 1934713408
        %v613 = vunpack.c.0.s8 %v612
        %v614 = vlaneseq
        %v615 = vshrl.u32 %v614, 7
        %v616 = vsub.s32 %v613, %v615
        %v617 = vrot.slane %v609, %v616
        %v619 = vunpack.c.l.s4 1934713408
        %v620 = vunpack.c.0.s8 %v619
        %v621 = vlaneseq
        %v622 = vshrl.u32 %v621, 7
        %v623 = vsub.s32 %v620, %v622
        %v624 = vrot.slane %v610, %v623
        %v625 = vcombine.high %v617, 0
        %v626 = vcombine.high %v624, 0
        %v629 = vunpack.c.l.s4 1983009808
        %v630 = vunpack.c.0.s8 %v629
        %v631 = vlaneseq
        %v632 = vshrl.u32 %v631, 7
        %v633 = vsub.s32 %v630, %v632
        %v634 = vrot.slane %v601, %v633
        %v635 = vcombine.high %v634, 0
        %v637 = vunpack.c.l.s4 1934713408
        %v638 = vunpack.c.0.s8 %v637
        %v639 = vlaneseq
        %v640 = vshrl.u32 %v639, 7
        %v641 = vsub.s32 %v638, %v640
        %v642 = vrot.slane %v634, %v641
        %v644 = vunpack.c.l.s4 1934713408
        %v645 = vunpack.c.0.s8 %v644
        %v646 = vlaneseq
        %v647 = vshrl.u32 %v646, 7
        %v648 = vsub.s32 %v645, %v647
        %v649 = vrot.slane %v635, %v648
        %v650 = vcombine.high %v642, 0
        %v651 = vcombine.high %v649, 0
        %v654 = vpack.i.b16 %v642, %v617
        %v656 = vshrl.u32 %v617, 16
        %v657 = vshrl.u32 %v642, 16
        %v658 = vpack.i.b16 %v657, %v656
        %v662 = vpack.i.b16 %v650, %v625
        %v664 = vshrl.u32 %v625, 16
        %v665 = vshrl.u32 %v650, 16
        %v666 = vpack.i.b16 %v665, %v664
        %v670 = vpack.i.b16 %v649, %v624
        %v672 = vshrl.u32 %v624, 16
        %v673 = vshrl.u32 %v649, 16
        %v674 = vpack.i.b16 %v673, %v672
        %v678 = vpack.i.b16 %v651, %v626
        %v680 = vshrl.u32 %v626, 16
        %v681 = vshrl.u32 %v651, 16
        %v682 = vpack.i.b16 %v681, %v680
        %v684 = vcombine.low %v654, %v670
        %v686 = vunpack.c.l.s4 1983009808
        %v687 = vunpack.c.0.s8 %v686
        %v688 = vlaneseq
        %v689 = vshrl.u32 %v688, 7
        %v690 = vsub.s32 %v687, %v689
        %v691 = vrot.slane %v684, %v690
        %v692 = vcombine.low %v662, %v678
        %v694 = vunpack.c.l.s4 1983009808
        %v695 = vunpack.c.0.s8 %v694
        %v696 = vlaneseq
        %v697 = vshrl.u32 %v696, 7
        %v698 = vsub.s32 %v695, %v697
        %v699 = vrot.slane %v692, %v698
        %v700 = vcombine.low %v691, %v699
        %v702 = vunpack.c.l.s4 1934713408
        %v703 = vunpack.c.0.s8 %v702
        %v704 = vlaneseq
        %v705 = vshrl.u32 %v704, 7
        %v706 = vsub.s32 %v703, %v705
        %v707 = vrot.slane %v700, %v706
        %v708 = vcombine.low %v658, %v674
        %v710 = vunpack.c.l.s4 1983009808
        %v711 = vunpack.c.0.s8 %v710
        %v712 = vlaneseq
        %v713 = vshrl.u32 %v712, 7
        %v714 = vsub.s32 %v711, %v713
        %v715 = vrot.slane %v708, %v714
        %v716 = vcombine.low %v666, %v682
        %v718 = vunpack.c.l.s4 1983009808
        %v719 = vunpack.c.0.s8 %v718
        %v720 = vlaneseq
        %v721 = vshrl.u32 %v720, 7
        %v722 = vsub.s32 %v719, %v721
        %v723 = vrot.slane %v716, %v722
        %v724 = vcombine.low %v715, %v723
        %v726 = vunpack.c.l.s4 1934713408
        %v727 = vunpack.c.0.s8 %v726
        %v728 = vlaneseq
        %v729 = vshrl.u32 %v728, 7
        %v730 = vsub.s32 %v727, %v729
        %v731 = vrot.slane %v724, %v730
        %v734 = vpack.i.b16 %v731, %v707
        %v735 = vshrl.u32 %v707, 16
        %v736 = vshrl.u32 %v731, 16
        %v737 = vpack.i.b16 %v736, %v735
        %vm738 = vcmask 130048
        %v740 = vsel %vm738, %v454, 0
        %v743 = vsel %vm738, %v594, 0
        %745 = vmatprep.subr.bf16.mxu0 0
        %746 = vmatpush1.bf16.xpose.msra.mxu0 0
        %747 = vmatprep.subr.bf16.mxu0 0
        %748 = vmatpush1.bf16.xpose.msra.mxu0 0
        %749 = vmatprep.subr.bf16.mxu0 0
        %750 = vmatpush1.bf16.xpose.msra.mxu0 0
        %751 = vmatprep.subr.bf16.mxu0 0
        %752 = vmatpush1.bf16.xpose.msra.mxu0 0
        %753 = vmatprep.subr.bf16.mxu0 0
        %754 = vmatpush1.bf16.xpose.msra.mxu0 0
        %755 = vmatprep.subr.bf16.mxu0 0
        %756 = vmatpush1.bf16.xpose.msra.mxu0 0
        %757 = vmatprep.subr.bf16.mxu0 0
        %758 = vmatpush1.bf16.xpose.msra.mxu0 0
        %759 = vmatprep.subr.bf16.mxu0 0
        %760 = vmatpush1.bf16.xpose.msra.mxu0 %v743
        %761 = vmatprep.subr.bf16.mxu0 0
        %762 = vmatpush2.bf16.xpose.msra.mxu0 0
        %763 = vmatprep.subr.bf16.mxu0 0
        %764 = vmatpush2.bf16.xpose.msra.mxu0 0
        %765 = vmatprep.subr.bf16.mxu0 0
        %766 = vmatpush2.bf16.xpose.msra.mxu0 0
        %767 = vmatprep.subr.bf16.mxu0 0
        %768 = vmatpush2.bf16.xpose.msra.mxu0 0
        %769 = vmatprep.subr.bf16.mxu0 0
        %770 = vmatpush2.bf16.xpose.msra.mxu0 0
        %771 = vmatprep.subr.bf16.mxu0 0
        %772 = vmatpush2.bf16.xpose.msra.mxu0 0
        %773 = vmatprep.subr.bf16.mxu0 0
        %774 = vmatpush2.bf16.xpose.msra.mxu0 0
        %775 = vmatprep.subr.bf16.mxu0 0
        %776 = vmatpush2.bf16.xpose.msra.mxu0 0
        %777 = vmatprep.mubr.bf16.mxu0 0
        %778 = vmatmul.mubr.bf16.gmra.mxu0 %v740
        %v779 = vpop.f32.mrf.mxu0
        %v780 = vadd.f32 0.0, %v779
        %v781 = vpop.f32.mrf.mxu0
        %v782 = vpop.f32.mrf.mxu0
        %v783 = vpop.f32.mrf.mxu0
        %784 = vdwg.mxu0
        %v786 = vsel %vm738, %v457, 0
        %v789 = vsel %vm738, %v597, 0
        %791 = vmatprep.subr.bf16.mxu0 0
        %792 = vmatpush1.bf16.xpose.msra.mxu0 0
        %793 = vmatprep.subr.bf16.mxu0 0
        %794 = vmatpush1.bf16.xpose.msra.mxu0 0
        %795 = vmatprep.subr.bf16.mxu0 0
        %796 = vmatpush1.bf16.xpose.msra.mxu0 0
        %797 = vmatprep.subr.bf16.mxu0 0
        %798 = vmatpush1.bf16.xpose.msra.mxu0 0
        %799 = vmatprep.subr.bf16.mxu0 0
        %800 = vmatpush1.bf16.xpose.msra.mxu0 0
        %801 = vmatprep.subr.bf16.mxu0 0
        %802 = vmatpush1.bf16.xpose.msra.mxu0 0
        %803 = vmatprep.subr.bf16.mxu0 0
        %804 = vmatpush1.bf16.xpose.msra.mxu0 0
        %805 = vmatprep.subr.bf16.mxu0 0
        %806 = vmatpush1.bf16.xpose.msra.mxu0 %v789
        %807 = vmatprep.subr.bf16.mxu0 0
        %808 = vmatpush2.bf16.xpose.msra.mxu0 0
        %809 = vmatprep.subr.bf16.mxu0 0
        %810 = vmatpush2.bf16.xpose.msra.mxu0 0
        %811 = vmatprep.subr.bf16.mxu0 0
        %812 = vmatpush2.bf16.xpose.msra.mxu0 0
        %813 = vmatprep.subr.bf16.mxu0 0
        %814 = vmatpush2.bf16.xpose.msra.mxu0 0
        %815 = vmatprep.subr.bf16.mxu0 0
        %816 = vmatpush2.bf16.xpose.msra.mxu0 0
        %817 = vmatprep.subr.bf16.mxu0 0
        %818 = vmatpush2.bf16.xpose.msra.mxu0 0
        %819 = vmatprep.subr.bf16.mxu0 0
        %820 = vmatpush2.bf16.xpose.msra.mxu0 0
        %821 = vmatprep.subr.bf16.mxu0 0
        %822 = vmatpush2.bf16.xpose.msra.mxu0 0
        %823 = vmatprep.mubr.bf16.mxu0 0
        %824 = vmatmul.mubr.bf16.gmra.mxu0 %v786
        %v825 = vpop.f32.mrf.mxu0
        %v826 = vadd.f32 0.0, %v825
        %v827 = vpop.f32.mrf.mxu0
        %v828 = vpop.f32.mrf.mxu0
        %v829 = vpop.f32.mrf.mxu0
        %830 = vdwg.mxu0
        %v831 = vmul.f32 %v780, 0.25
        %v832 = vmul.f32 %v826, 0.25
        %v834 = vlaneseq
        %v835 = vshrl.u32 %v834, 7
        %v836 = vsub.s32 0, %v835
        %v837 = vrot.slane %v258, %v836
        %v839 = vadd.f32 %v831, %v837
        %v840 = vadd.f32 %v832, %v837
        %vm841 = vcmask 64512
        %v842 = vsel %vm841, %v839, -inf
        %843 = vmax.xlane.f32.xlu0 %v842
        %v844 = vpop.xlane.xlu0 %843
        %v845 = vsel %vm841, %v840, -inf
        %846 = vmax.xlane.f32.xlu0 %v845
        %v847 = vpop.xlane.xlu0 %846
        %v848 = vsub.f32 %v839, %v844
        %v849 = vsub.f32 %v840, %v847
        %v850 = vmul.f32 %v848, 1.442695
        %v851 = vpow.pop %v850
        %v852 = vmul.f32 %v849, 1.442695
        %v853 = vpow.pop %v852
        %v854 = vsel %vm841, %v851, 0.0
        %855 = vadd.xlane.f32.xlu0 %v854
        %v856 = vpop.xlane.xlu0 %855
        %v857 = vsel %vm841, %v853, 0.0
        %858 = vadd.xlane.f32.xlu0 %v857
        %v859 = vpop.xlane.xlu0 %858
        %v860 = vrcp.pop %v856
        %v861 = vrcp.pop %v859
        %v862 = vmul.f32 %v851, %v860
        %v863 = vmul.f32 %v853, %v861
        %v864 = vpack.c.bf16 %v862, %v862
        %v865 = vpack.c.bf16 %v863, %v863
        %v867 = vsel %vm841, %v864, 0
        %vm869 = vcmask 1043456
        %v871 = vsel %vm869, %v734, 0
        %873 = vmatprep.subr.bf16.mxu0 0
        %874 = vmatpush1.bf16.msra.mxu0 0
        %875 = vmatprep.subr.bf16.mxu0 0
        %876 = vmatpush1.bf16.msra.mxu0 0
        %877 = vmatprep.subr.bf16.mxu0 0
        %878 = vmatpush1.bf16.msra.mxu0 0
        %879 = vmatprep.subr.bf16.mxu0 0
        %880 = vmatpush1.bf16.msra.mxu0 0
        %881 = vmatprep.subr.bf16.mxu0 0
        %882 = vmatpush1.bf16.msra.mxu0 0
        %883 = vmatprep.subr.bf16.mxu0 0
        %884 = vmatpush1.bf16.msra.mxu0 0
        %885 = vmatprep.subr.bf16.mxu0 0
        %886 = vmatpush1.bf16.msra.mxu0 0
        %887 = vmatprep.subr.bf16.mxu0 0
        %888 = vmatpush1.bf16.msra.mxu0 %v871
        %889 = vmatprep.subr.bf16.mxu0 0
        %890 = vmatpush2.bf16.msra.mxu0 0
        %891 = vmatprep.subr.bf16.mxu0 0
        %892 = vmatpush2.bf16.msra.mxu0 0
        %893 = vmatprep.subr.bf16.mxu0 0
        %894 = vmatpush2.bf16.msra.mxu0 0
        %895 = vmatprep.subr.bf16.mxu0 0
        %896 = vmatpush2.bf16.msra.mxu0 0
        %897 = vmatprep.subr.bf16.mxu0 0
        %898 = vmatpush2.bf16.msra.mxu0 0
        %899 = vmatprep.subr.bf16.mxu0 0
        %900 = vmatpush2.bf16.msra.mxu0 0
        %901 = vmatprep.subr.bf16.mxu0 0
        %902 = vmatpush2.bf16.msra.mxu0 0
        %903 = vmatprep.subr.bf16.mxu0 0
        %904 = vmatpush2.bf16.msra.mxu0 0
        %905 = vmatprep.mubr.bf16.mxu0 0
        %906 = vmatmul.mubr.bf16.gmra.mxu0 %v867
        %v907 = vpop.f32.mrf.mxu0
        %v908 = vadd.f32 0.0, %v907
        %v909 = vpop.f32.mrf.mxu0
        %v910 = vpop.f32.mrf.mxu0
        %v911 = vpop.f32.mrf.mxu0
        %912 = vdwg.mxu0
        %v914 = vsel %vm841, %v865, 0
        %v917 = vsel %vm869, %v737, 0
        %919 = vmatprep.subr.bf16.mxu0 0
        %920 = vmatpush1.bf16.msra.mxu0 0
        %921 = vmatprep.subr.bf16.mxu0 0
        %922 = vmatpush1.bf16.msra.mxu0 0
        %923 = vmatprep.subr.bf16.mxu0 0
        %924 = vmatpush1.bf16.msra.mxu0 0
        %925 = vmatprep.subr.bf16.mxu0 0
        %926 = vmatpush1.bf16.msra.mxu0 0
        %927 = vmatprep.subr.bf16.mxu0 0
        %928 = vmatpush1.bf16.msra.mxu0 0
        %929 = vmatprep.subr.bf16.mxu0 0
        %930 = vmatpush1.bf16.msra.mxu0 0
        %931 = vmatprep.subr.bf16.mxu0 0
        %932 = vmatpush1.bf16.msra.mxu0 0
        %933 = vmatprep.subr.bf16.mxu0 0
        %934 = vmatpush1.bf16.msra.mxu0 %v917
        %935 = vmatprep.subr.bf16.mxu0 0
        %936 = vmatpush2.bf16.msra.mxu0 0
        %937 = vmatprep.subr.bf16.mxu0 0
        %938 = vmatpush2.bf16.msra.mxu0 0
        %939 = vmatprep.subr.bf16.mxu0 0
        %940 = vmatpush2.bf16.msra.mxu0 0
        %941 = vmatprep.subr.bf16.mxu0 0
        %942 = vmatpush2.bf16.msra.mxu0 0
        %943 = vmatprep.subr.bf16.mxu0 0
        %944 = vmatpush2.bf16.msra.mxu0 0
        %945 = vmatprep.subr.bf16.mxu0 0
        %946 = vmatpush2.bf16.msra.mxu0 0
        %947 = vmatprep.subr.bf16.mxu0 0
        %948 = vmatpush2.bf16.msra.mxu0 0
        %949 = vmatprep.subr.bf16.mxu0 0
        %950 = vmatpush2.bf16.msra.mxu0 0
        %951 = vmatprep.mubr.bf16.mxu0 0
        %952 = vmatmul.mubr.bf16.gmra.mxu0 %v914
        %v953 = vpop.f32.mrf.mxu0
        %v954 = vadd.f32 0.0, %v953
        %v955 = vpop.f32.mrf.mxu0
        %v956 = vpop.f32.mrf.mxu0
        %v957 = vpop.f32.mrf.mxu0
        %958 = vdwg.mxu0
        %v959 = vcombine.high %v908, 0.0
        %v961 = vunpack.c.l.s4 1983009808
        %v962 = vunpack.c.0.s8 %v961
        %v963 = vlaneseq
        %v964 = vshrl.u32 %v963, 7
        %v965 = vsub.s32 %v962, %v964
        %v966 = vrot.slane %v908, %v965
        %v968 = vunpack.c.l.s4 1983009808
        %v969 = vunpack.c.0.s8 %v968
        %v970 = vlaneseq
        %v971 = vshrl.u32 %v970, 7
        %v972 = vsub.s32 %v969, %v971
        %v973 = vrot.slane %v959, %v972
        %v974 = vcombine.high %v954, 0.0
        %v976 = vunpack.c.l.s4 1983009808
        %v977 = vunpack.c.0.s8 %v976
        %v978 = vlaneseq
        %v979 = vshrl.u32 %v978, 7
        %v980 = vsub.s32 %v977, %v979
        %v981 = vrot.slane %v954, %v980
        %v983 = vunpack.c.l.s4 1983009808
        %v984 = vunpack.c.0.s8 %v983
        %v985 = vlaneseq
        %v986 = vshrl.u32 %v985, 7
        %v987 = vsub.s32 %v984, %v986
        %v988 = vrot.slane %v974, %v987
        %v989 = vcombine.low %v966, %v981
        %v990 = vcombine.high %v966, %v981
        %v992 = vunpack.c.l.s4 1934713408
        %v993 = vunpack.c.0.s8 %v992
        %v994 = vlaneseq
        %v995 = vshrl.u32 %v994, 7
        %v996 = vsub.s32 %v993, %v995
        %v997 = vrot.slane %v989, %v996
        %v999 = vunpack.c.l.s4 1934713408
        %v1000 = vunpack.c.0.s8 %v999
        %v1001 = vlaneseq
        %v1002 = vshrl.u32 %v1001, 7
        %v1003 = vsub.s32 %v1000, %v1002
        %v1004 = vrot.slane %v990, %v1003
        %v1005 = vcombine.low %v973, %v988
        %v1006 = vcombine.high %v973, %v988
        %v1008 = vunpack.c.l.s4 1934713408
        %v1009 = vunpack.c.0.s8 %v1008
        %v1010 = vlaneseq
        %v1011 = vshrl.u32 %v1010, 7
        %v1012 = vsub.s32 %v1009, %v1011
        %v1013 = vrot.slane %v1005, %v1012
        %v1015 = vunpack.c.l.s4 1934713408
        %v1016 = vunpack.c.0.s8 %v1015
        %v1017 = vlaneseq
        %v1018 = vshrl.u32 %v1017, 7
        %v1019 = vsub.s32 %v1016, %v1018
        %v1020 = vrot.slane %v1006, %v1019
        %v1021 = vcombine.high %v997, 0.0
        %v1022 = vcombine.high %v1004, 0.0
        %v1023 = vcombine.high %v1013, 0.0
        %v1024 = vcombine.high %v1020, 0.0
        %v1025 = vcombine.low %v997, %v1004
        %v1027 = vunpack.c.l.s4 1983009808
        %v1028 = vunpack.c.0.s8 %v1027
        %v1029 = vlaneseq
        %v1030 = vshrl.u32 %v1029, 7
        %v1031 = vsub.s32 %v1028, %v1030
        %v1032 = vrot.slane %v1025, %v1031
        %v1033 = vcombine.low %v1021, %v1022
        %v1035 = vunpack.c.l.s4 1983009808
        %v1036 = vunpack.c.0.s8 %v1035
        %v1037 = vlaneseq
        %v1038 = vshrl.u32 %v1037, 7
        %v1039 = vsub.s32 %v1036, %v1038
        %v1040 = vrot.slane %v1033, %v1039
        %v1041 = vcombine.low %v1013, %v1020
        %v1043 = vunpack.c.l.s4 1983009808
        %v1044 = vunpack.c.0.s8 %v1043
        %v1045 = vlaneseq
        %v1046 = vshrl.u32 %v1045, 7
        %v1047 = vsub.s32 %v1044, %v1046
        %v1048 = vrot.slane %v1041, %v1047
        %v1049 = vcombine.low %v1023, %v1024
        %v1051 = vunpack.c.l.s4 1983009808
        %v1052 = vunpack.c.0.s8 %v1051
        %v1053 = vlaneseq
        %v1054 = vshrl.u32 %v1053, 7
        %v1055 = vsub.s32 %v1052, %v1054
        %v1056 = vrot.slane %v1049, %v1055
        %v1057 = vcombine.low %v1032, %v1040
        %v1059 = vunpack.c.l.s4 1934713408
        %v1060 = vunpack.c.0.s8 %v1059
        %v1061 = vlaneseq
        %v1062 = vshrl.u32 %v1061, 7
        %v1063 = vsub.s32 %v1060, %v1062
        %v1064 = vrot.slane %v1057, %v1063
        %v1065 = vcombine.low %v1048, %v1056
        %v1067 = vunpack.c.l.s4 1934713408
        %v1068 = vunpack.c.0.s8 %v1067
        %v1069 = vlaneseq
        %v1070 = vshrl.u32 %v1069, 7
        %v1071 = vsub.s32 %v1068, %v1070
        %v1072 = vrot.slane %v1065, %v1071
        %v1073 = vcombine.low %v1064, %v1072
        %v1074 = vcombine.high %v1064, %v1072
        %1076 = vrot.lane.b32.xlu0 %v1074, 16
        %v1077 = vpop.permute.xlu0 %1076
        %v1079 = vsel %vm738, %v1073, %v1077
        %v1080 = vpack.c.bf16 %v1079, %v1079
        %v1081 = vld [vmem:[#allocation7] sm:$0xf]
        %v1082 = vld [vmem:[#allocation7 + $0x4] sm:$0xf]
        %v1083 = vld [vmem:[#allocation7 + $0x8] sm:$0xf]
        %v1084 = vld [vmem:[#allocation7 + $0xc] sm:$0xf]
        %v1089 = vunpack.c.l.b16 %v1081
        %v1090 = vunpack.c.l.b16 %v1082
        %v1091 = vunpack.c.l.b16 %v1083
        %v1092 = vunpack.c.l.b16 %v1084
        %v1093 = vpack.c.b16 %v1090, %v1089
        %v1094 = vpack.c.b16 %v1092, %v1091
        %v1098 = vsel %vm275, %v1080, 0
        %1100 = vmatprep.subr.bf16.mxu0 0
        %1101 = vmatpush1.bf16.msra.mxu0 0
        %1102 = vmatprep.subr.bf16.mxu0 0
        %1103 = vmatpush1.bf16.msra.mxu0 0
        %1104 = vmatprep.subr.bf16.mxu0 0
        %1105 = vmatpush1.bf16.msra.mxu0 0
        %1106 = vmatprep.subr.bf16.mxu0 0
        %1107 = vmatpush1.bf16.msra.mxu0 0
        %1108 = vmatprep.subr.bf16.mxu0 0
        %1109 = vmatpush1.bf16.msra.mxu0 0
        %1110 = vmatprep.subr.bf16.mxu0 0
        %1111 = vmatpush1.bf16.msra.mxu0 0
        %1112 = vmatprep.subr.bf16.mxu0 0
        %1113 = vmatpush1.bf16.msra.mxu0 %v1094
        %1114 = vmatprep.subr.bf16.mxu0 0
        %1115 = vmatpush1.bf16.msra.mxu0 %v1093
        %1116 = vmatprep.subr.bf16.mxu0 0
        %1117 = vmatpush2.bf16.msra.mxu0 0
        %1118 = vmatprep.subr.bf16.mxu0 0
        %1119 = vmatpush2.bf16.msra.mxu0 0
        %1120 = vmatprep.subr.bf16.mxu0 0
        %1121 = vmatpush2.bf16.msra.mxu0 0
        %1122 = vmatprep.subr.bf16.mxu0 0
        %1123 = vmatpush2.bf16.msra.mxu0 0
        %1124 = vmatprep.subr.bf16.mxu0 0
        %1125 = vmatpush2.bf16.msra.mxu0 0
        %1126 = vmatprep.subr.bf16.mxu0 0
        %1127 = vmatpush2.bf16.msra.mxu0 0
        %1128 = vmatprep.subr.bf16.mxu0 0
        %1129 = vmatpush2.bf16.msra.mxu0 0
        %1130 = vmatprep.subr.bf16.mxu0 0
        %1131 = vmatpush2.bf16.msra.mxu0 0
        %1132 = vmatprep.mubr.bf16.mxu0 0
        %1133 = vmatmul.mubr.bf16.gmra.mxu0 %v1098
        %v1134 = vpop.f32.mrf.mxu0
        %v1135 = vadd.f32 0.0, %v1134
        %v1136 = vpop.f32.mrf.mxu0
        %v1137 = vpop.f32.mrf.mxu0
        %v1138 = vpop.f32.mrf.mxu0
        %1139 = vdwg.mxu0
        %v1140 = vunpack.c.l.bf16 %v257
        %v1141 = vadd.f32 %v1140, %v1135
        %v1142 = vpack.c.bf16 %v1141, %v1141
        %vm1143 = vcmask 257024
        %1144 = vst.msk [vmem:[%s252] sm:$0xf] %vm1143, %v1142
        %s1145 = sand.u32 %s124, 1
        %s1146 = scalar_lea.sflag [#allocation4], %s1145
        %s1147 = sand.u32 %s124, 1
        %s1148 = smul.addr %s1147, 4
        %s1149 = scalar_lea.vmem [#allocation8], %s1148
        // Predicated region
        $region49: #{tpu_custom_call.1} parent=35 // pred_check
          %p1150 = pneg %p134
        $region50: #{tpu_custom_call.1} parent=35 // pred_check_branch
          %1152 = sbr.rel (%p1150) target = $region52
        $region51: #{tpu_custom_call.1} parent=35 // pred_region
          %s1154 = ssub.s32 64, 64
          %1155 = vsyncadd %s1146, %s1154
          %s1156 = smul.addr %s22, 64
          %s1157 = scalar_lea.hbm %s4, %s1156
          %s1159 = sshll.u32 %s1149, 4
          %s1160 = int_to_ptr.vmem [resolvable:$true] %s1159
          %1162 = dma.vmem_to_hbm [thread:$0]  %s1160, 64, %s1157, %s1146
        $region52: #{tpu_custom_call.1} parent=35 // pred_fallthru
          _
      $region36: #{tpu_custom_call.1} parent=5 // pred_fallthru
        _
      %p1163 = scmp.le.s32.totalorder 2, %s17
      // Predicated region
      $region53: #{tpu_custom_call.1} parent=5 // pred_check
        %p1164 = pneg %p1163
      $region54: #{tpu_custom_call.1} parent=5 // pred_check_branch
        %1166 = sbr.rel (%p1164) target = $region56
      $region55: #{tpu_custom_call.1} parent=5 // pred_region
        %s1167 = ssub.s32 %s17, 2
        // Predicated region
        $region57: #{tpu_custom_call.1} parent=55 // pred_check
          %p1168 = pneg %p140
        $region58: #{tpu_custom_call.1} parent=55 // pred_check_branch
          %1170 = sbr.rel (%p1168) target = $region60
        $region59: #{tpu_custom_call.1} parent=55 // pred_region
          %s1171 = sand.u32 %s125, 1
          %s1172 = scalar_lea.sflag [#allocation4], %s1171
          %s1173 = sand.u32 %s125, 1
          %s1174 = smul.addr %s1173, 4
          %s1175 = scalar_lea.vmem [#allocation8], %s1174
          %1176 = dma.done %s1172, 64
        $region60: #{tpu_custom_call.1} parent=55 // pred_fallthru
          _
      $region56: #{tpu_custom_call.1} parent=5 // pred_fallthru
        _
    $region6: #{tpu_custom_call.1} parent=1 // loop_footer
      %s21 = sadd.s32 1, %s17
    $region7: #{tpu_custom_call.1} parent=1 // loop_footer_branch
      %16 = sbr.rel target = $region3
    $region8: #{tpu_custom_call.1} parent=1 // loop_exit
      _
    %1177 = vsyncpa [#allocation3], 1
    %s1178 = scalar_lea.sflag [#allocation3], 1
    %1179 = vsyncpa %s1178, 1
    %1180 = vsyncpa [#allocation6], 1
    %1181 = vsyncpa [#allocation4], 1
    %s1182 = scalar_lea.sflag [#allocation4], 1
    %1183 = vsyncpa %s1182, 1

</llo_original>
